<compile_context>
chip_gen: v7x
topology: tpu7x:2x2x1
jax: 0.10.0
libtpu: 0.0.40
codegen_flags: <defaults>
</compile_context>

<pallas_src>
import functools

import jax
import jax.numpy as jnp
from jax.experimental import pallas as pl
from jax.experimental.pallas import tpu as pltpu

D_OUT = 1000           # nn.Linear(..., out_features=1000)
D_OUT_PAD = 1024       # padded to a multiple of 128 lanes
BN_EPS = 0.001


@functools.lru_cache(maxsize=1)
def _default_tn() -> int:
    """Feature-tile width. v7x has 2 TensorCores -> TN=512 gives exactly one
    feature tile per core under the 'parallel' grid axis; single-core v5e/v6e
    take all 1024 lanes in one tile (fewer grid steps, x streamed once)."""
    try:
        kind = jax.devices()[0].device_kind.lower()
    except Exception:
        return 512
    return 512 if "v7" in kind else 1024


def _choose_tk(d_in: int):
    """Pick the reduction-axis tile. Returns (tk, padded_d_in)."""
    if d_in <= 4096:
        return d_in, d_in                      # single K block (full-dim block is legal)
    for tk in (4096, 2048, 1024, 512):
        if d_in % tk == 0:
            return tk, d_in
    # Irregular large D_in: zero-pad to a multiple of 512 so the K sweep stays
    # pipelined/double-buffered instead of one monolithic VMEM-busting block.
    padded = ((d_in + 511) // 512) * 512
    return 512, padded


def _linear_bn_relu_kernel(x_ref, w_ref, gb_ref, o_ref):
    # x_ref:  (B, TK)   activations in their native dtype (cast in-kernel)
    # w_ref:  (TK, TN)  pre-transposed weight tile (bf16 by default)
    # gb_ref: (2, TN)   row 0 = gamma, row 1 = beta (f32)
    # o_ref:  (B, TN)   f32 output block, resident across the K axis
    k = pl.program_id(1)
    nk = pl.num_programs(1)

    @pl.when(k == 0)
    def _init():
        o_ref[...] = jnp.zeros_like(o_ref)

    # In-kernel VPU cast (no wrapper-side astype / extra HBM round-trip of x).
    x = x_ref[...].astype(w_ref.dtype)
    # The f32 output block is resident across K (its index_map ignores k), so
    # it doubles as the accumulator -- no scratch buffer, no extra copy.
    o_ref[...] += jnp.dot(x, w_ref[...], preferred_element_type=jnp.float32)

    @pl.when(k == nk - 1)
    def _epilogue():
        y = o_ref[...]                                    # (B, TN) f32
        inv_b = 1.0 / y.shape[0]
        # Training-mode BatchNorm1d: per-feature batch mean + biased variance.
        mean = jnp.sum(y, axis=0, keepdims=True) * inv_b
        centered = y - mean
        var = jnp.sum(centered * centered, axis=0, keepdims=True) * inv_b
        gb = gb_ref[...]                                  # (2, TN)
        scale = jax.lax.rsqrt(var + BN_EPS) * gb[0:1, :]  # gamma folded in
        shift = gb[1:2, :]
        # Affine + ReLU: one mul, one add, one max over the (B, TN) tile.
        o_ref[...] = jnp.maximum(centered * scale + shift, 0.0)


@functools.partial(jax.jit, static_argnames=("slice_output",))
def linear_model_forward(x, w_t, gb, slice_output=True):
    """x: (B, D_in) activations (any float dtype; cast in-kernel).
    w_t: (D_in_pad, 1024) pre-transposed, zero-padded weight.
    gb:  (2, 1024) gamma (row 0) / beta (row 1).
    Returns (B, 1000), or the zero-padded (B, 1024) block if slice_output=False.

    NOTE: for throughput, callers should stack batches so B >= 128 (v5e) /
    256 (v6e, v7x) and ideally a multiple of 16; at tiny B the kernel is
    weight-DMA / launch-latency bound.
    """
    B, d_in = x.shape
    d_in_pad, d_out_pad = w_t.shape
    assert d_out_pad == D_OUT_PAD
    assert gb.shape == (2, D_OUT_PAD)
    if d_in_pad != d_in:
        # Irregular large D_in was zero-padded at init time; mirror it on x.
        x = jnp.pad(x, ((0, 0), (0, d_in_pad - d_in)))

    tn = _default_tn()
    assert D_OUT_PAD % tn == 0
    tk, _ = _choose_tk(d_in_pad)
    assert d_in_pad % tk == 0
    nj = D_OUT_PAD // tn
    nk = d_in_pad // tk

    cost = pl.CostEstimate(
        flops=2 * B * d_in_pad * D_OUT_PAD,
        transcendentals=0,
        bytes_accessed=(d_in_pad * D_OUT_PAD * w_t.dtype.itemsize   # weights (once)
                        + nj * B * d_in_pad * x.dtype.itemsize      # x re-streamed per j
                        + B * D_OUT_PAD * 4),                       # f32 output
    )

    out_padded = pl.pallas_call(
        _linear_bn_relu_kernel,
        out_shape=jax.ShapeDtypeStruct((B, D_OUT_PAD), jnp.float32),
        grid=(nj, nk),                        # reduction axis last
        in_specs=[
            pl.BlockSpec((B, tk), lambda j, k: (0, k)),
            pl.BlockSpec((tk, tn), lambda j, k: (k, j)),
            pl.BlockSpec((2, tn), lambda j, k: (0, j)),
        ],
        out_specs=pl.BlockSpec((B, tn), lambda j, k: (0, j)),
        compiler_params=pltpu.CompilerParams(
            # Feature tiles independent -> megacore-parallel on v7x; K accumulated.
            dimension_semantics=("parallel", "arbitrary"),
            # Tiles are small (<= ~8 MiB/buffer even at TK=4096, TN=1024 bf16);
            # 48 MiB leaves headroom on v7x's 64 MiB physical VMEM.
            vmem_limit_bytes=48 * 1024 * 1024,
        ),
        cost_estimate=cost,
    )(x, w_t, gb)

    if slice_output:
        # 1000 is not lane-aligned, so this is an extra masked-store copy kept
        # only for exact module-output shape; pass slice_output=False when the
        # consumer tolerates the zero-padded (B, 1024) layout.
        return out_padded[:, :D_OUT]
    return out_padded


def init_params(key, input_size, param_dtype=jnp.bfloat16):
    """Deterministic synthetic parameters matching the PyTorch module shapes.

    The linear bias is intentionally omitted: under training-mode BatchNorm it
    cancels exactly in (y - mean(y)).  Weights are stored pre-transposed,
    zero-padded to 1024 output features (and to the padded D_in when D_in is
    large and irregular), and cast to `param_dtype` (bf16 by default) once at
    init time -- never inside the hot path.
    """
    bound = 1.0 / float(input_size) ** 0.5
    w = jax.random.uniform(key, (D_OUT, input_size), jnp.float32, -bound, bound)
    gamma = jnp.ones((D_OUT,), jnp.float32)   # BatchNorm1d affine init
    beta = jnp.zeros((D_OUT,), jnp.float32)

    _, d_in_pad = _choose_tk(input_size)
    pad_in = d_in_pad - input_size
    pad_out = D_OUT_PAD - D_OUT
    w_t = jnp.pad(w.T, ((0, pad_in), (0, pad_out))).astype(param_dtype)
    gb = jnp.stack([jnp.pad(gamma, (0, pad_out)),
                    jnp.pad(beta, (0, pad_out))], axis=0)           # (2, 1024) f32
    return w_t, gb


if __name__ == "__main__":
    key = jax.random.PRNGKey(0)
    k_x, k_p = jax.random.split(key)

    batch = 8          # NOTE: latency-bound at this size; stack batches to
    input_size = 32    # B >= 128/256 for real throughput (see wrapper docstring).
    x = jax.random.normal(k_x, (batch, input_size), jnp.float32)

    w_t, gb = init_params(k_p, input_size)          # bf16 weights by default

    out = linear_model_forward(x, w_t, gb)
    jax.block_until_ready(out)

    # Pure-JAX reference on the same bf16-rounded operands, f32 math.
    xf = x.astype(w_t.dtype).astype(jnp.float32)
    wf = w_t.astype(jnp.float32)[:input_size, :D_OUT]
    y = xf @ wf
    mean = jnp.mean(y, axis=0, keepdims=True)
    var = jnp.mean((y - mean) ** 2, axis=0, keepdims=True)
    ref = jnp.maximum((y - mean) / jnp.sqrt(var + BN_EPS)
                      * gb[0, :D_OUT] + gb[1, :D_OUT], 0.0)

    assert out.shape == (batch, D_OUT)
    assert jnp.allclose(out, ref, atol=2e-4, rtol=2e-4), \
        float(jnp.max(jnp.abs(out - ref)))

    print("KERNEL_OK")
</pallas_src>

<mosaic_0001>
module attributes {stable_mosaic.version = 11 : i64} {
  func.func @_linear_bn_relu_kernel(%arg0: i32, %arg1: i32, %arg2: memref<8x32xf32, #tpu.memory_space<vmem>>, %arg3: memref<32x1024xbf16, #tpu.memory_space<vmem>>, %arg4: memref<2x1024xf32, #tpu.memory_space<vmem>>, %arg5: memref<8x1024xf32, #tpu.memory_space<vmem>>) attributes {dimension_semantics = [#tpu.dimension_semantics<parallel>, #tpu.dimension_semantics<arbitrary>], iteration_bounds = array<i64: 1, 1>, scalar_prefetch = 0 : i64, scratch_operands = 0 : i64, tpu.core_type = #tpu.core_type<tc>, window_params = [{transform_indices = @transform_0, window_bounds = array<i64: 8, 32>}, {transform_indices = @transform_1, window_bounds = array<i64: 32, 1024>}, {transform_indices = @transform_2, window_bounds = array<i64: 2, 1024>}, {transform_indices = @transform_3, window_bounds = array<i64: 8, 1024>}]} {
    %c0_i32 = arith.constant 0 : i32
    %0 = arith.cmpi eq, %arg1, %c0_i32 : i32
    %1 = arith.extui %0 : i1 to i32
    %c0_i32_0 = arith.constant 0 : i32
    %2 = arith.cmpi ne, %1, %c0_i32_0 : i32
    scf.if %2 {
      %cst_10 = arith.constant 0.000000e+00 : f32
      %13 = vector.broadcast %cst_10 : f32 to vector<8x1024xf32>
      %c0_11 = arith.constant 0 : index
      %c0_12 = arith.constant 0 : index
      %14 = vector.load %arg5[%c0_11, %c0_12] : memref<8x1024xf32, #tpu.memory_space<vmem>>, vector<8x1024xf32>
      tpu.vector_store %arg5[%c0_11, %c0_12], %13 {strides = array<i32>} : memref<8x1024xf32, #tpu.memory_space<vmem>>, vector<8x1024xf32>,
    } else {
    }
    %c0 = arith.constant 0 : index
    %c0_1 = arith.constant 0 : index
    %3 = vector.load %arg2[%c0, %c0_1] : memref<8x32xf32, #tpu.memory_space<vmem>>, vector<8x32xf32>
    %4 = arith.truncf %3 : vector<8x32xf32> to vector<8x32xbf16>
    %c0_2 = arith.constant 0 : index
    %c0_3 = arith.constant 0 : index
    %5 = vector.load %arg5[%c0_2, %c0_3] : memref<8x1024xf32, #tpu.memory_space<vmem>>, vector<8x1024xf32>
    %c0_4 = arith.constant 0 : index
    %c0_5 = arith.constant 0 : index
    %6 = vector.load %arg3[%c0_4, %c0_5] : memref<32x1024xbf16, #tpu.memory_space<vmem>>, vector<32x1024xbf16>
    %cst = arith.constant dense<0.000000e+00> : vector<8x1024xf32>
    %7 = tpu.matmul %4, %6, %cst {dimension_numbers = #tpu.dot_dimension_numbers<[1], [0], [0], [1], [0, 0, 1, 1], [], []>} : vector<8x32xbf16>, vector<32x1024xbf16>, vector<8x1024xf32> -> vector<8x1024xf32>
    %8 = arith.addf %5, %7 : vector<8x1024xf32>
    %c0_6 = arith.constant 0 : index
    %c0_7 = arith.constant 0 : index
    %9 = vector.load %arg5[%c0_6, %c0_7] : memref<8x1024xf32, #tpu.memory_space<vmem>>, vector<8x1024xf32>
    tpu.vector_store %arg5[%c0_6, %c0_7], %8 {strides = array<i32>} : memref<8x1024xf32, #tpu.memory_space<vmem>>, vector<8x1024xf32>,
    %c0_i32_8 = arith.constant 0 : i32
    %10 = arith.cmpi eq, %arg1, %c0_i32_8 : i32
    %11 = arith.extui %10 : i1 to i32
    %c0_i32_9 = arith.constant 0 : i32
    %12 = arith.cmpi ne, %11, %c0_i32_9 : i32
    scf.if %12 {
      %c0_10 = arith.constant 0 : index
      %c0_11 = arith.constant 0 : index
      %13 = vector.load %arg5[%c0_10, %c0_11] : memref<8x1024xf32, #tpu.memory_space<vmem>>, vector<8x1024xf32>
      %cst_12 = arith.constant dense<0.000000e+00> : vector<1024xf32>
      %14 = vector.multi_reduction <add>, %13, %cst_12 [0] : vector<8x1024xf32> to vector<1024xf32>
      %15 = vector.shape_cast %14 : vector<1024xf32> to vector<1x1024xf32>
      %cst_13 = arith.constant 1.250000e-01 : f32
      %16 = vector.broadcast %cst_13 : f32 to vector<1x1024xf32>
      %17 = arith.mulf %15, %16 : vector<1x1024xf32>
      %18 = vector.broadcast %17 : vector<1x1024xf32> to vector<8x1024xf32>
      %19 = arith.subf %13, %18 : vector<8x1024xf32>
      %20 = arith.mulf %19, %19 : vector<8x1024xf32>
      %cst_14 = arith.constant dense<0.000000e+00> : vector<1024xf32>
      %21 = vector.multi_reduction <add>, %20, %cst_14 [0] : vector<8x1024xf32> to vector<1024xf32>
      %22 = vector.shape_cast %21 : vector<1024xf32> to vector<1x1024xf32>
      %cst_15 = arith.constant 1.250000e-01 : f32
      %23 = vector.broadcast %cst_15 : f32 to vector<1x1024xf32>
      %24 = arith.mulf %22, %23 : vector<1x1024xf32>
      %c0_16 = arith.constant 0 : index
      %c0_17 = arith.constant 0 : index
      %25 = vector.load %arg4[%c0_16, %c0_17] : memref<2x1024xf32, #tpu.memory_space<vmem>>, vector<2x1024xf32>
      %cst_18 = arith.constant 1.000000e-03 : f32
      %26 = vector.broadcast %cst_18 : f32 to vector<1x1024xf32>
      %27 = arith.addf %24, %26 : vector<1x1024xf32>
      %28 = math.rsqrt %27 : vector<1x1024xf32>
      %29 = vector.extract_strided_slice %25 {offsets = [0, 0], sizes = [1, 1024], strides = [1, 1]} : vector<2x1024xf32> to vector<1x1024xf32>
      %30 = arith.mulf %28, %29 : vector<1x1024xf32>
      %31 = vector.extract_strided_slice %25 {offsets = [1, 0], sizes = [1, 1024], strides = [1, 1]} : vector<2x1024xf32> to vector<1x1024xf32>
      %32 = vector.broadcast %30 : vector<1x1024xf32> to vector<8x1024xf32>
      %33 = arith.mulf %19, %32 : vector<8x1024xf32>
      %34 = vector.broadcast %31 : vector<1x1024xf32> to vector<8x1024xf32>
      %35 = arith.addf %33, %34 : vector<8x1024xf32>
      %cst_19 = arith.constant 0.000000e+00 : f32
      %36 = vector.broadcast %cst_19 : f32 to vector<8x1024xf32>
      %37 = arith.maximumf %35, %36 : vector<8x1024xf32>
      %c0_20 = arith.constant 0 : index
      %c0_21 = arith.constant 0 : index
      %38 = vector.load %arg5[%c0_20, %c0_21] : memref<8x1024xf32, #tpu.memory_space<vmem>>, vector<8x1024xf32>
      tpu.vector_store %arg5[%c0_20, %c0_21], %37 {strides = array<i32>} : memref<8x1024xf32, #tpu.memory_space<vmem>>, vector<8x1024xf32>,
    } else {
    }
    return
  }
  func.func @transform_0(%arg0: i32, %arg1: i32) -> (i32, i32) {
    %c0_i32 = arith.constant 0 : i32
    %c0_i32_0 = arith.constant 0 : i32
    return %c0_i32, %arg1 : i32, i32
  }
  func.func @transform_1(%arg0: i32, %arg1: i32) -> (i32, i32) {
    %c0_i32 = arith.constant 0 : i32
    return %arg1, %arg0 : i32, i32
  }
  func.func @transform_2(%arg0: i32, %arg1: i32) -> (i32, i32) {
    %c0_i32 = arith.constant 0 : i32
    %c0_i32_0 = arith.constant 0 : i32
    return %c0_i32, %arg0 : i32, i32
  }
  func.func @transform_3(%arg0: i32, %arg1: i32) -> (i32, i32) {
    %c0_i32 = arith.constant 0 : i32
    %c0_i32_0 = arith.constant 0 : i32
    return %c0_i32, %arg0 : i32, i32
  }
}

</mosaic_0001>

<llo_original>
// kernel: linear_model_forward.1
$region0: #{linear_model_forward.1}
  #allocation0 [shape = 'u32[]', space=smem, size = 0x4, offset = 0x4, fixed_abs, tag = 'smem constant byte address 0x4 - core index']
  #allocation1 [shape = 'u32[144,128]{1,0:T(1,128)}', space=vmem, size = 0x12000, scoped, tag = 'internal scratch']
  %s0 = inlined_call_operand.hbm [shape: f32[8,32], index: 0, kind: input, shape index: {}]
  %s1 = inlined_call_operand.hbm [shape: bf16[32,1024], index: 1, kind: input, shape index: {}]
  %s2 = inlined_call_operand.hbm [shape: f32[2,1024], index: 2, kind: input, shape index: {}]
  %s3 = inlined_call_operand.hbm [shape: f32[8,1024], index: 3, kind: output, shape index: {}]
  %s4 = sld [smem:[#allocation0]]
  $region42: #{linear_model_forward.1} parent=0
    _
  %s6 = ssub.s32 1, %s4
  %s7 = scalar_select 0, %s6, %s4
  $region1: #{linear_model_forward.1} parent=0
    #allocation2 [shape = 'u8[4096]{0}', space=vmem, size = 0x1000, scoped, tag = 'input window, operand 0, single buffered']
    #allocation3 [shape = 's32[1]{0}', space=sflag, size = 0x4, scoped, tag = 'scoped memory for linear_model_forward.1']
    #allocation4 [shape = 's32[1]{0}', space=sflag, size = 0x4, scoped, tag = 'scoped memory for linear_model_forward.1']
    #allocation5 [shape = 'u8[65536]{0}', space=vmem, size = 0x10000, scoped, tag = 'input window, operand 1, single buffered']
    #allocation6 [shape = 's32[1]{0}', space=sflag, size = 0x4, scoped, tag = 'scoped memory for linear_model_forward.1']
    #allocation7 [shape = 'u8[8192]{0}', space=vmem, size = 0x2000, scoped, tag = 'input window, operand 2, single buffered']
    #allocation8 [shape = 'u8[32768]{0}', space=vmem, size = 0x8000, scoped, tag = 'output window, operand 0, single buffered']
    %8 = vsyncpa [#allocation3], 0
    %9 = vsyncpa [#allocation6], 0
    %10 = vsyncpa [#allocation4], 0
    // Predicated region
    $region2: #{linear_model_forward.1} parent=1 // pred_check
      _
    $region3: #{linear_model_forward.1} parent=1 // pred_check_branch
      %12 = sbr.rel (0) target = $region5
    $region4: #{linear_model_forward.1} parent=1 // pred_region
      %s14 = ssub.s32 128, 128
      %15 = vsyncadd [#allocation3], %s14
      %s17 = sshll.u32 [#allocation2], 4
      %s18 = int_to_ptr.vmem [resolvable:$true] %s17
      %20 = dma.hbm_to_vmem [thread:$0]  %s0, 128, %s18, [#allocation3]
    $region5: #{linear_model_forward.1} parent=1 // pred_fallthru
      _
    // Predicated region
    $region6: #{linear_model_forward.1} parent=1 // pred_check
      _
    $region7: #{linear_model_forward.1} parent=1 // pred_check_branch
      %22 = sbr.rel (0) target = $region9
    $region8: #{linear_model_forward.1} parent=1 // pred_region
      %s24 = ssub.s32 2048, 2048
      %25 = vsyncadd [#allocation6], %s24
      %s26 = sshll.u32 [#allocation5], 4
      %s27 = int_to_ptr.vmem [resolvable:$true] %s26
      %32 = dma.hbm_to_vmem [thread:$0]  %s1, 2048, %s27, [#allocation6], 512, 512, 32
    $region9: #{linear_model_forward.1} parent=1 // pred_fallthru
      _
    // Predicated region
    $region10: #{linear_model_forward.1} parent=1 // pred_check
      _
    $region11: #{linear_model_forward.1} parent=1 // pred_check_branch
      %34 = sbr.rel (0) target = $region13
    $region12: #{linear_model_forward.1} parent=1 // pred_region
      %s36 = ssub.s32 256, 256
      %37 = vsyncadd [#allocation6], %s36
      %s39 = sshll.u32 [#allocation7], 4
      %s40 = int_to_ptr.vmem [resolvable:$true] %s39
      %42 = dma.hbm_to_vmem [thread:$0]  %s2, 256, %s40, [#allocation6]
    $region13: #{linear_model_forward.1} parent=1 // pred_fallthru
      _
    // Predicated region
    $region14: #{linear_model_forward.1} parent=1 // pred_check
      _
    $region15: #{linear_model_forward.1} parent=1 // pred_check_branch
      %44 = sbr.rel (0) target = $region17
    $region16: #{linear_model_forward.1} parent=1 // pred_region
      %45 = dma.done [#allocation3], 128
    $region17: #{linear_model_forward.1} parent=1 // pred_fallthru
      _
    // Predicated region
    $region18: #{linear_model_forward.1} parent=1 // pred_check
      _
    $region19: #{linear_model_forward.1} parent=1 // pred_check_branch
      %47 = sbr.rel (0) target = $region21
    $region20: #{linear_model_forward.1} parent=1 // pred_region
      %48 = dma.done [#allocation6], 2048
    $region21: #{linear_model_forward.1} parent=1 // pred_fallthru
      _
    // Predicated region
    $region22: #{linear_model_forward.1} parent=1 // pred_check
      _
    $region23: #{linear_model_forward.1} parent=1 // pred_check_branch
      %50 = sbr.rel (0) target = $region25
    $region24: #{linear_model_forward.1} parent=1 // pred_region
      %51 = dma.done [#allocation6], 256
    $region25: #{linear_model_forward.1} parent=1 // pred_fallthru
      _
    %p53 = scmp.eq.s32.totalorder 0, 0
    // Predicated region
    $region26: #{linear_model_forward.1} parent=1 // pred_check
      %p54 = pneg %p53
    $region27: #{linear_model_forward.1} parent=1 // pred_check_branch
      %56 = sbr.rel (%p54) target = $region29
    $region28: #{linear_model_forward.1} parent=1 // pred_region
      %57 = vst [vmem:[#allocation8] sm:$0xff] 0.0
      %58 = vst [vmem:[#allocation8 + $0x8] sm:$0xff] 0.0
      %59 = vst [vmem:[#allocation8 + $0x10] sm:$0xff] 0.0
      %60 = vst [vmem:[#allocation8 + $0x18] sm:$0xff] 0.0
      %61 = vst [vmem:[#allocation8 + $0x20] sm:$0xff] 0.0
      %62 = vst [vmem:[#allocation8 + $0x28] sm:$0xff] 0.0
      %63 = vst [vmem:[#allocation8 + $0x30] sm:$0xff] 0.0
      %64 = vst [vmem:[#allocation8 + $0x38] sm:$0xff] 0.0
    $region29: #{linear_model_forward.1} parent=1 // pred_fallthru
      _
    %v65 = vld [vmem:[#allocation2] sm:$0xff]
    %v66 = vpack.c.bf16 %v65, %v65
    %v67 = vld [vmem:[#allocation8] sm:$0xff]
    %v68 = vld [vmem:[#allocation8 + $0x8] sm:$0xff]
    %v69 = vld [vmem:[#allocation8 + $0x10] sm:$0xff]
    %v70 = vld [vmem:[#allocation8 + $0x18] sm:$0xff]
    %v71 = vld [vmem:[#allocation8 + $0x20] sm:$0xff]
    %v72 = vld [vmem:[#allocation8 + $0x28] sm:$0xff]
    %v73 = vld [vmem:[#allocation8 + $0x30] sm:$0xff]
    %v74 = vld [vmem:[#allocation8 + $0x38] sm:$0xff]
    %v75 = vld [vmem:[#allocation5] sm:$0xff]
    %v76 = vld [vmem:[#allocation5 + $0x8] sm:$0xff]
    %v77 = vld [vmem:[#allocation5 + $0x10] sm:$0xff]
    %v78 = vld [vmem:[#allocation5 + $0x18] sm:$0xff]
    %v79 = vld [vmem:[#allocation5 + $0x20] sm:$0xff]
    %v80 = vld [vmem:[#allocation5 + $0x28] sm:$0xff]
    %v81 = vld [vmem:[#allocation5 + $0x30] sm:$0xff]
    %v82 = vld [vmem:[#allocation5 + $0x38] sm:$0xff]
    %v83 = vld [vmem:[#allocation5 + $0x40] sm:$0xff]
    %v84 = vld [vmem:[#allocation5 + $0x48] sm:$0xff]
    %v85 = vld [vmem:[#allocation5 + $0x50] sm:$0xff]
    %v86 = vld [vmem:[#allocation5 + $0x58] sm:$0xff]
    %v87 = vld [vmem:[#allocation5 + $0x60] sm:$0xff]
    %v88 = vld [vmem:[#allocation5 + $0x68] sm:$0xff]
    %v89 = vld [vmem:[#allocation5 + $0x70] sm:$0xff]
    %v90 = vld [vmem:[#allocation5 + $0x78] sm:$0xff]
    %v107 = vunpack.c.l.b16 %v75
    %v108 = vunpack.c.h.b16 %v75
    %v109 = vunpack.c.l.b16 %v76
    %v110 = vunpack.c.h.b16 %v76
    %v111 = vunpack.c.l.b16 %v77
    %v112 = vunpack.c.h.b16 %v77
    %v113 = vunpack.c.l.b16 %v78
    %v114 = vunpack.c.h.b16 %v78
    %v115 = vunpack.c.l.b16 %v79
    %v116 = vunpack.c.h.b16 %v79
    %v117 = vunpack.c.l.b16 %v80
    %v118 = vunpack.c.h.b16 %v80
    %v119 = vunpack.c.l.b16 %v81
    %v120 = vunpack.c.h.b16 %v81
    %v121 = vunpack.c.l.b16 %v82
    %v122 = vunpack.c.h.b16 %v82
    %v123 = vunpack.c.l.b16 %v83
    %v124 = vunpack.c.h.b16 %v83
    %v125 = vunpack.c.l.b16 %v84
    %v126 = vunpack.c.h.b16 %v84
    %v127 = vunpack.c.l.b16 %v85
    %v128 = vunpack.c.h.b16 %v85
    %v129 = vunpack.c.l.b16 %v86
    %v130 = vunpack.c.h.b16 %v86
    %v131 = vunpack.c.l.b16 %v87
    %v132 = vunpack.c.h.b16 %v87
    %v133 = vunpack.c.l.b16 %v88
    %v134 = vunpack.c.h.b16 %v88
    %v135 = vunpack.c.l.b16 %v89
    %v136 = vunpack.c.h.b16 %v89
    %v137 = vunpack.c.l.b16 %v90
    %v138 = vunpack.c.h.b16 %v90
    %v139 = vpack.c.b16 %v115, %v107
    %v140 = vpack.c.b16 %v116, %v108
    %v141 = vpack.c.b16 %v117, %v109
    %v142 = vpack.c.b16 %v118, %v110
    %v143 = vpack.c.b16 %v119, %v111
    %v144 = vpack.c.b16 %v120, %v112
    %v145 = vpack.c.b16 %v121, %v113
    %v146 = vpack.c.b16 %v122, %v114
    %v147 = vpack.c.b16 %v131, %v123
    %v148 = vpack.c.b16 %v132, %v124
    %v149 = vpack.c.b16 %v133, %v125
    %v150 = vpack.c.b16 %v134, %v126
    %v151 = vpack.c.b16 %v135, %v127
    %v152 = vpack.c.b16 %v136, %v128
    %v153 = vpack.c.b16 %v137, %v129
    %v154 = vpack.c.b16 %v138, %v130
    %vm171 = vcmask 261120
    %v173 = vsel %vm171, %v66, 0
    %175 = vmatprep.subr.bf16.mxu0 %v140
    %176 = vmatpush1.bf16.msra.mxu0 %v139
    %177 = vmatprep.subr.bf16.mxu0 %v148
    %178 = vmatpush1.bf16.msra.mxu0 %v147
    %179 = vmatprep.subr.bf16.mxu0 0
    %180 = vmatpush1.bf16.msra.mxu0 0
    %181 = vmatprep.subr.bf16.mxu0 0
    %182 = vmatpush1.bf16.msra.mxu0 0
    %183 = vmatprep.subr.bf16.mxu0 0
    %184 = vmatpush1.bf16.msra.mxu0 0
    %185 = vmatprep.subr.bf16.mxu0 0
    %186 = vmatpush1.bf16.msra.mxu0 0
    %187 = vmatprep.subr.bf16.mxu0 0
    %188 = vmatpush1.bf16.msra.mxu0 0
    %189 = vmatprep.subr.bf16.mxu0 0
    %190 = vmatpush1.bf16.msra.mxu0 0
    %191 = vmatprep.subr.bf16.mxu0 0
    %192 = vmatpush1.bf16.msra.mxu0 0
    %193 = vmatprep.subr.bf16.mxu0 0
    %194 = vmatpush1.bf16.msra.mxu0 0
    %195 = vmatprep.subr.bf16.mxu0 0
    %196 = vmatpush1.bf16.msra.mxu0 0
    %197 = vmatprep.subr.bf16.mxu0 0
    %198 = vmatpush1.bf16.msra.mxu0 0
    %199 = vmatprep.subr.bf16.mxu0 0
    %200 = vmatpush1.bf16.msra.mxu0 0
    %201 = vmatprep.subr.bf16.mxu0 0
    %202 = vmatpush1.bf16.msra.mxu0 0
    %203 = vmatprep.subr.bf16.mxu0 0
    %204 = vmatpush1.bf16.msra.mxu0 0
    %205 = vmatprep.subr.bf16.mxu0 0
    %206 = vmatpush1.bf16.msra.mxu0 0
    %207 = vmatprep.mubr.bf16.mxu0 0
    %208 = vmatmul.mubr.bf16.gmra.mrb[0].mxu0 %v173
    %v209 = vpop.f32.mrb[0].mxu0
    %v210 = vadd.f32 0.0, %v209
    %v211 = vpop.f32.mrb[0].mxu0
    %v212 = vadd.f32 0.0, %v211
    %v213 = vpop.f32.mrb[0].mxu0
    %v214 = vpop.f32.mrb[0].mxu0
    %215 = vdwg.mxu0
    %216 = vmatprep.subr.bf16.mxu0 %v142
    %217 = vmatpush1.bf16.msra.mxu0 %v141
    %218 = vmatprep.subr.bf16.mxu0 %v150
    %219 = vmatpush1.bf16.msra.mxu0 %v149
    %220 = vmatprep.subr.bf16.mxu0 0
    %221 = vmatpush1.bf16.msra.mxu0 0
    %222 = vmatprep.subr.bf16.mxu0 0
    %223 = vmatpush1.bf16.msra.mxu0 0
    %224 = vmatprep.subr.bf16.mxu0 0
    %225 = vmatpush1.bf16.msra.mxu0 0
    %226 = vmatprep.subr.bf16.mxu0 0
    %227 = vmatpush1.bf16.msra.mxu0 0
    %228 = vmatprep.subr.bf16.mxu0 0
    %229 = vmatpush1.bf16.msra.mxu0 0
    %230 = vmatprep.subr.bf16.mxu0 0
    %231 = vmatpush1.bf16.msra.mxu0 0
    %232 = vmatprep.subr.bf16.mxu0 0
    %233 = vmatpush1.bf16.msra.mxu0 0
    %234 = vmatprep.subr.bf16.mxu0 0
    %235 = vmatpush1.bf16.msra.mxu0 0
    %236 = vmatprep.subr.bf16.mxu0 0
    %237 = vmatpush1.bf16.msra.mxu0 0
    %238 = vmatprep.subr.bf16.mxu0 0
    %239 = vmatpush1.bf16.msra.mxu0 0
    %240 = vmatprep.subr.bf16.mxu0 0
    %241 = vmatpush1.bf16.msra.mxu0 0
    %242 = vmatprep.subr.bf16.mxu0 0
    %243 = vmatpush1.bf16.msra.mxu0 0
    %244 = vmatprep.subr.bf16.mxu0 0
    %245 = vmatpush1.bf16.msra.mxu0 0
    %246 = vmatprep.subr.bf16.mxu0 0
    %247 = vmatpush1.bf16.msra.mxu0 0
    %248 = vmatprep.mubr.bf16.mxu0 0
    %249 = vmatmul.mubr.bf16.gmra.mrb[0].mxu0 %v173
    %v250 = vpop.f32.mrb[0].mxu0
    %v251 = vadd.f32 0.0, %v250
    %v252 = vpop.f32.mrb[0].mxu0
    %v253 = vadd.f32 0.0, %v252
    %v254 = vpop.f32.mrb[0].mxu0
    %v255 = vpop.f32.mrb[0].mxu0
    %256 = vdwg.mxu0
    %257 = vmatprep.subr.bf16.mxu0 %v144
    %258 = vmatpush1.bf16.msra.mxu0 %v143
    %259 = vmatprep.subr.bf16.mxu0 %v152
    %260 = vmatpush1.bf16.msra.mxu0 %v151
    %261 = vmatprep.subr.bf16.mxu0 0
    %262 = vmatpush1.bf16.msra.mxu0 0
    %263 = vmatprep.subr.bf16.mxu0 0
    %264 = vmatpush1.bf16.msra.mxu0 0
    %265 = vmatprep.subr.bf16.mxu0 0
    %266 = vmatpush1.bf16.msra.mxu0 0
    %267 = vmatprep.subr.bf16.mxu0 0
    %268 = vmatpush1.bf16.msra.mxu0 0
    %269 = vmatprep.subr.bf16.mxu0 0
    %270 = vmatpush1.bf16.msra.mxu0 0
    %271 = vmatprep.subr.bf16.mxu0 0
    %272 = vmatpush1.bf16.msra.mxu0 0
    %273 = vmatprep.subr.bf16.mxu0 0
    %274 = vmatpush1.bf16.msra.mxu0 0
    %275 = vmatprep.subr.bf16.mxu0 0
    %276 = vmatpush1.bf16.msra.mxu0 0
    %277 = vmatprep.subr.bf16.mxu0 0
    %278 = vmatpush1.bf16.msra.mxu0 0
    %279 = vmatprep.subr.bf16.mxu0 0
    %280 = vmatpush1.bf16.msra.mxu0 0
    %281 = vmatprep.subr.bf16.mxu0 0
    %282 = vmatpush1.bf16.msra.mxu0 0
    %283 = vmatprep.subr.bf16.mxu0 0
    %284 = vmatpush1.bf16.msra.mxu0 0
    %285 = vmatprep.subr.bf16.mxu0 0
    %286 = vmatpush1.bf16.msra.mxu0 0
    %287 = vmatprep.subr.bf16.mxu0 0
    %288 = vmatpush1.bf16.msra.mxu0 0
    %289 = vmatprep.mubr.bf16.mxu0 0
    %290 = vmatmul.mubr.bf16.gmra.mrb[0].mxu0 %v173
    %v291 = vpop.f32.mrb[0].mxu0
    %v292 = vadd.f32 0.0, %v291
    %v293 = vpop.f32.mrb[0].mxu0
    %v294 = vadd.f32 0.0, %v293
    %v295 = vpop.f32.mrb[0].mxu0
    %v296 = vpop.f32.mrb[0].mxu0
    %297 = vdwg.mxu0
    %298 = vmatprep.subr.bf16.mxu0 %v146
    %299 = vmatpush1.bf16.msra.mxu0 %v145
    %300 = vmatprep.subr.bf16.mxu0 %v154
    %301 = vmatpush1.bf16.msra.mxu0 %v153
    %302 = vmatprep.subr.bf16.mxu0 0
    %303 = vmatpush1.bf16.msra.mxu0 0
    %304 = vmatprep.subr.bf16.mxu0 0
    %305 = vmatpush1.bf16.msra.mxu0 0
    %306 = vmatprep.subr.bf16.mxu0 0
    %307 = vmatpush1.bf16.msra.mxu0 0
    %308 = vmatprep.subr.bf16.mxu0 0
    %309 = vmatpush1.bf16.msra.mxu0 0
    %310 = vmatprep.subr.bf16.mxu0 0
    %311 = vmatpush1.bf16.msra.mxu0 0
    %312 = vmatprep.subr.bf16.mxu0 0
    %313 = vmatpush1.bf16.msra.mxu0 0
    %314 = vmatprep.subr.bf16.mxu0 0
    %315 = vmatpush1.bf16.msra.mxu0 0
    %316 = vmatprep.subr.bf16.mxu0 0
    %317 = vmatpush1.bf16.msra.mxu0 0
    %318 = vmatprep.subr.bf16.mxu0 0
    %319 = vmatpush1.bf16.msra.mxu0 0
    %320 = vmatprep.subr.bf16.mxu0 0
    %321 = vmatpush1.bf16.msra.mxu0 0
    %322 = vmatprep.subr.bf16.mxu0 0
    %323 = vmatpush1.bf16.msra.mxu0 0
    %324 = vmatprep.subr.bf16.mxu0 0
    %325 = vmatpush1.bf16.msra.mxu0 0
    %326 = vmatprep.subr.bf16.mxu0 0
    %327 = vmatpush1.bf16.msra.mxu0 0
    %328 = vmatprep.subr.bf16.mxu0 0
    %329 = vmatpush1.bf16.msra.mxu0 0
    %330 = vmatprep.mubr.bf16.mxu0 0
    %331 = vmatmul.mubr.bf16.gmra.mrb[0].mxu0 %v173
    %v332 = vpop.f32.mrb[0].mxu0
    %v333 = vadd.f32 0.0, %v332
    %v334 = vpop.f32.mrb[0].mxu0
    %v335 = vadd.f32 0.0, %v334
    %v336 = vpop.f32.mrb[0].mxu0
    %v337 = vpop.f32.mrb[0].mxu0
    %338 = vdwg.mxu0
    %v339 = vadd.f32 %v67, %v210
    %v340 = vadd.f32 %v68, %v212
    %v341 = vadd.f32 %v69, %v251
    %v342 = vadd.f32 %v70, %v253
    %v343 = vadd.f32 %v71, %v292
    %v344 = vadd.f32 %v72, %v294
    %v345 = vadd.f32 %v73, %v333
    %v346 = vadd.f32 %v74, %v335
    %347 = vst [vmem:[#allocation8] sm:$0xff] %v339
    %348 = vst [vmem:[#allocation8 + $0x8] sm:$0xff] %v340
    %349 = vst [vmem:[#allocation8 + $0x10] sm:$0xff] %v341
    %350 = vst [vmem:[#allocation8 + $0x18] sm:$0xff] %v342
    %351 = vst [vmem:[#allocation8 + $0x20] sm:$0xff] %v343
    %352 = vst [vmem:[#allocation8 + $0x28] sm:$0xff] %v344
    %353 = vst [vmem:[#allocation8 + $0x30] sm:$0xff] %v345
    %354 = vst [vmem:[#allocation8 + $0x38] sm:$0xff] %v346
    // Predicated region
    $region30: #{linear_model_forward.1} parent=1 // pred_check
      %p355 = pneg %p53
    $region31: #{linear_model_forward.1} parent=1 // pred_check_branch
      %357 = sbr.rel (%p355) target = $region33
    $region32: #{linear_model_forward.1} parent=1 // pred_region
      %v358 = vld [vmem:[#allocation8] sm:$0xff]
      %v359 = vld [vmem:[#allocation8 + $0x8] sm:$0xff]
      %v360 = vld [vmem:[#allocation8 + $0x10] sm:$0xff]
      %v361 = vld [vmem:[#allocation8 + $0x18] sm:$0xff]
      %v362 = vld [vmem:[#allocation8 + $0x20] sm:$0xff]
      %v363 = vld [vmem:[#allocation8 + $0x28] sm:$0xff]
      %v364 = vld [vmem:[#allocation8 + $0x30] sm:$0xff]
      %v365 = vld [vmem:[#allocation8 + $0x38] sm:$0xff]
      %v366 = vrot.slane %v358, 4
      %v367 = vadd.f32 %v358, %v366
      %v368 = vrot.slane %v367, 2
      %v369 = vadd.f32 %v367, %v368
      %v370 = vrot.slane %v369, 1
      %v371 = vadd.f32 %v369, %v370
      %v372 = vrot.slane %v359, 4
      %v373 = vadd.f32 %v359, %v372
      %v374 = vrot.slane %v373, 2
      %v375 = vadd.f32 %v373, %v374
      %v376 = vrot.slane %v375, 1
      %v377 = vadd.f32 %v375, %v376
      %v378 = vrot.slane %v360, 4
      %v379 = vadd.f32 %v360, %v378
      %v380 = vrot.slane %v379, 2
      %v381 = vadd.f32 %v379, %v380
      %v382 = vrot.slane %v381, 1
      %v383 = vadd.f32 %v381, %v382
      %v384 = vrot.slane %v361, 4
      %v385 = vadd.f32 %v361, %v384
      %v386 = vrot.slane %v385, 2
      %v387 = vadd.f32 %v385, %v386
      %v388 = vrot.slane %v387, 1
      %v389 = vadd.f32 %v387, %v388
      %v390 = vrot.slane %v362, 4
      %v391 = vadd.f32 %v362, %v390
      %v392 = vrot.slane %v391, 2
      %v393 = vadd.f32 %v391, %v392
      %v394 = vrot.slane %v393, 1
      %v395 = vadd.f32 %v393, %v394
      %v396 = vrot.slane %v363, 4
      %v397 = vadd.f32 %v363, %v396
      %v398 = vrot.slane %v397, 2
      %v399 = vadd.f32 %v397, %v398
      %v400 = vrot.slane %v399, 1
      %v401 = vadd.f32 %v399, %v400
      %v402 = vrot.slane %v364, 4
      %v403 = vadd.f32 %v364, %v402
      %v404 = vrot.slane %v403, 2
      %v405 = vadd.f32 %v403, %v404
      %v406 = vrot.slane %v405, 1
      %v407 = vadd.f32 %v405, %v406
      %v408 = vrot.slane %v365, 4
      %v409 = vadd.f32 %v365, %v408
      %v410 = vrot.slane %v409, 2
      %v411 = vadd.f32 %v409, %v410
      %v412 = vrot.slane %v411, 1
      %v413 = vadd.f32 %v411, %v412
      %v414 = vmul.f32 %v371, 0.125
      %v415 = vmul.f32 %v377, 0.125
      %v416 = vmul.f32 %v383, 0.125
      %v417 = vmul.f32 %v389, 0.125
      %v418 = vmul.f32 %v395, 0.125
      %v419 = vmul.f32 %v401, 0.125
      %v420 = vmul.f32 %v407, 0.125
      %v421 = vmul.f32 %v413, 0.125
      %v422 = vsub.f32 %v358, %v414
      %v423 = vsub.f32 %v359, %v415
      %v424 = vsub.f32 %v360, %v416
      %v425 = vsub.f32 %v361, %v417
      %v426 = vsub.f32 %v362, %v418
      %v427 = vsub.f32 %v363, %v419
      %v428 = vsub.f32 %v364, %v420
      %v429 = vsub.f32 %v365, %v421
      %v430 = vmul.f32 %v422, %v422
      %v431 = vmul.f32 %v423, %v423
      %v432 = vmul.f32 %v424, %v424
      %v433 = vmul.f32 %v425, %v425
      %v434 = vmul.f32 %v426, %v426
      %v435 = vmul.f32 %v427, %v427
      %v436 = vmul.f32 %v428, %v428
      %v437 = vmul.f32 %v429, %v429
      %v438 = vrot.slane %v430, 4
      %v439 = vadd.f32 %v430, %v438
      %v440 = vrot.slane %v439, 2
      %v441 = vadd.f32 %v439, %v440
      %v442 = vrot.slane %v441, 1
      %v443 = vadd.f32 %v441, %v442
      %v444 = vrot.slane %v431, 4
      %v445 = vadd.f32 %v431, %v444
      %v446 = vrot.slane %v445, 2
      %v447 = vadd.f32 %v445, %v446
      %v448 = vrot.slane %v447, 1
      %v449 = vadd.f32 %v447, %v448
      %v450 = vrot.slane %v432, 4
      %v451 = vadd.f32 %v432, %v450
      %v452 = vrot.slane %v451, 2
      %v453 = vadd.f32 %v451, %v452
      %v454 = vrot.slane %v453, 1
      %v455 = vadd.f32 %v453, %v454
      %v456 = vrot.slane %v433, 4
      %v457 = vadd.f32 %v433, %v456
      %v458 = vrot.slane %v457, 2
      %v459 = vadd.f32 %v457, %v458
      %v460 = vrot.slane %v459, 1
      %v461 = vadd.f32 %v459, %v460
      %v462 = vrot.slane %v434, 4
      %v463 = vadd.f32 %v434, %v462
      %v464 = vrot.slane %v463, 2
      %v465 = vadd.f32 %v463, %v464
      %v466 = vrot.slane %v465, 1
      %v467 = vadd.f32 %v465, %v466
      %v468 = vrot.slane %v435, 4
      %v469 = vadd.f32 %v435, %v468
      %v470 = vrot.slane %v469, 2
      %v471 = vadd.f32 %v469, %v470
      %v472 = vrot.slane %v471, 1
      %v473 = vadd.f32 %v471, %v472
      %v474 = vrot.slane %v436, 4
      %v475 = vadd.f32 %v436, %v474
      %v476 = vrot.slane %v475, 2
      %v477 = vadd.f32 %v475, %v476
      %v478 = vrot.slane %v477, 1
      %v479 = vadd.f32 %v477, %v478
      %v480 = vrot.slane %v437, 4
      %v481 = vadd.f32 %v437, %v480
      %v482 = vrot.slane %v481, 2
      %v483 = vadd.f32 %v481, %v482
      %v484 = vrot.slane %v483, 1
      %v485 = vadd.f32 %v483, %v484
      %v486 = vmul.f32 %v443, 0.125
      %v487 = vmul.f32 %v449, 0.125
      %v488 = vmul.f32 %v455, 0.125
      %v489 = vmul.f32 %v461, 0.125
      %v490 = vmul.f32 %v467, 0.125
      %v491 = vmul.f32 %v473, 0.125
      %v492 = vmul.f32 %v479, 0.125
      %v493 = vmul.f32 %v485, 0.125
      %v494 = vld [vmem:[#allocation7] sm:$0xff]
      %v495 = vld [vmem:[#allocation7 + $0x8] sm:$0xff]
      %v496 = vadd.f32 %v486, 0.001
      %v497 = vadd.f32 %v487, 0.001
      %v498 = vadd.f32 %v488, 0.001
      %v499 = vadd.f32 %v489, 0.001
      %v500 = vadd.f32 %v490, 0.001
      %v501 = vadd.f32 %v491, 0.001
      %v502 = vadd.f32 %v492, 0.001
      %v503 = vadd.f32 %v493, 0.001
      %v504 = vrsqrt.pop %v496
      %v505 = vrsqrt.pop %v497
      %v506 = vrsqrt.pop %v498
      %v507 = vrsqrt.pop %v499
      %v508 = vrsqrt.pop %v500
      %v509 = vrsqrt.pop %v501
      %v510 = vrsqrt.pop %v502
      %v511 = vrsqrt.pop %v503
      %v514 = vlaneseq
      %v515 = vshrl.u32 %v514, 7
      %v516 = vsub.s32 0, %v515
      %v517 = vrot.slane %v494, %v516
      %v518 = vlaneseq
      %v519 = vshrl.u32 %v518, 7
      %v520 = vsub.s32 2, %v519
      %v521 = vrot.slane %v494, %v520
      %v522 = vlaneseq
      %v523 = vshrl.u32 %v522, 7
      %v524 = vsub.s32 4, %v523
      %v525 = vrot.slane %v494, %v524
      %v526 = vlaneseq
      %v527 = vshrl.u32 %v526, 7
      %v528 = vsub.s32 6, %v527
      %v529 = vrot.slane %v494, %v528
      %v530 = vlaneseq
      %v531 = vshrl.u32 %v530, 7
      %v532 = vsub.s32 0, %v531
      %v533 = vrot.slane %v495, %v532
      %v534 = vlaneseq
      %v535 = vshrl.u32 %v534, 7
      %v536 = vsub.s32 2, %v535
      %v537 = vrot.slane %v495, %v536
      %v538 = vlaneseq
      %v539 = vshrl.u32 %v538, 7
      %v540 = vsub.s32 4, %v539
      %v541 = vrot.slane %v495, %v540
      %v542 = vlaneseq
      %v543 = vshrl.u32 %v542, 7
      %v544 = vsub.s32 6, %v543
      %v545 = vrot.slane %v495, %v544
      %v554 = vmul.f32 %v504, %v517
      %v555 = vmul.f32 %v505, %v521
      %v556 = vmul.f32 %v506, %v525
      %v557 = vmul.f32 %v507, %v529
      %v558 = vmul.f32 %v508, %v533
      %v559 = vmul.f32 %v509, %v537
      %v560 = vmul.f32 %v510, %v541
      %v561 = vmul.f32 %v511, %v545
      %v562 = vlaneseq
      %v563 = vshrl.u32 %v562, 7
      %v564 = vsub.s32 0, %v563
      %v565 = vrot.slane %v554, %v564
      %v566 = vlaneseq
      %v567 = vshrl.u32 %v566, 7
      %v568 = vsub.s32 0, %v567
      %v569 = vrot.slane %v555, %v568
      %v570 = vlaneseq
      %v571 = vshrl.u32 %v570, 7
      %v572 = vsub.s32 0, %v571
      %v573 = vrot.slane %v556, %v572
      %v574 = vlaneseq
      %v575 = vshrl.u32 %v574, 7
      %v576 = vsub.s32 0, %v575
      %v577 = vrot.slane %v557, %v576
      %v578 = vlaneseq
      %v579 = vshrl.u32 %v578, 7
      %v580 = vsub.s32 0, %v579
      %v581 = vrot.slane %v558, %v580
      %v582 = vlaneseq
      %v583 = vshrl.u32 %v582, 7
      %v584 = vsub.s32 0, %v583
      %v585 = vrot.slane %v559, %v584
      %v586 = vlaneseq
      %v587 = vshrl.u32 %v586, 7
      %v588 = vsub.s32 0, %v587
      %v589 = vrot.slane %v560, %v588
      %v590 = vlaneseq
      %v591 = vshrl.u32 %v590, 7
      %v592 = vsub.s32 0, %v591
      %v593 = vrot.slane %v561, %v592
      %v594 = vmul.f32 %v422, %v565
      %v595 = vmul.f32 %v423, %v569
      %v596 = vmul.f32 %v424, %v573
      %v597 = vmul.f32 %v425, %v577
      %v598 = vmul.f32 %v426, %v581
      %v599 = vmul.f32 %v427, %v585
      %v600 = vmul.f32 %v428, %v589
      %v601 = vmul.f32 %v429, %v593
      %v602 = vlaneseq
      %v603 = vshrl.u32 %v602, 7
      %v604 = vsub.s32 1, %v603
      %v605 = vrot.slane %v494, %v604
      %v606 = vlaneseq
      %v607 = vshrl.u32 %v606, 7
      %v608 = vsub.s32 3, %v607
      %v609 = vrot.slane %v494, %v608
      %v610 = vlaneseq
      %v611 = vshrl.u32 %v610, 7
      %v612 = vsub.s32 5, %v611
      %v613 = vrot.slane %v494, %v612
      %v614 = vlaneseq
      %v615 = vshrl.u32 %v614, 7
      %v616 = vsub.s32 7, %v615
      %v617 = vrot.slane %v494, %v616
      %v618 = vlaneseq
      %v619 = vshrl.u32 %v618, 7
      %v620 = vsub.s32 1, %v619
      %v621 = vrot.slane %v495, %v620
      %v622 = vlaneseq
      %v623 = vshrl.u32 %v622, 7
      %v624 = vsub.s32 3, %v623
      %v625 = vrot.slane %v495, %v624
      %v626 = vlaneseq
      %v627 = vshrl.u32 %v626, 7
      %v628 = vsub.s32 5, %v627
      %v629 = vrot.slane %v495, %v628
      %v630 = vlaneseq
      %v631 = vshrl.u32 %v630, 7
      %v632 = vsub.s32 7, %v631
      %v633 = vrot.slane %v495, %v632
      %v642 = vlaneseq
      %v643 = vshrl.u32 %v642, 7
      %v644 = vsub.s32 1, %v643
      %v645 = vrot.slane %v605, %v644
      %v646 = vlaneseq
      %v647 = vshrl.u32 %v646, 7
      %v648 = vsub.s32 1, %v647
      %v649 = vrot.slane %v609, %v648
      %v650 = vlaneseq
      %v651 = vshrl.u32 %v650, 7
      %v652 = vsub.s32 1, %v651
      %v653 = vrot.slane %v613, %v652
      %v654 = vlaneseq
      %v655 = vshrl.u32 %v654, 7
      %v656 = vsub.s32 1, %v655
      %v657 = vrot.slane %v617, %v656
      %v658 = vlaneseq
      %v659 = vshrl.u32 %v658, 7
      %v660 = vsub.s32 1, %v659
      %v661 = vrot.slane %v621, %v660
      %v662 = vlaneseq
      %v663 = vshrl.u32 %v662, 7
      %v664 = vsub.s32 1, %v663
      %v665 = vrot.slane %v625, %v664
      %v666 = vlaneseq
      %v667 = vshrl.u32 %v666, 7
      %v668 = vsub.s32 1, %v667
      %v669 = vrot.slane %v629, %v668
      %v670 = vlaneseq
      %v671 = vshrl.u32 %v670, 7
      %v672 = vsub.s32 1, %v671
      %v673 = vrot.slane %v633, %v672
      %v674 = vadd.f32 %v594, %v645
      %v675 = vadd.f32 %v595, %v649
      %v676 = vadd.f32 %v596, %v653
      %v677 = vadd.f32 %v597, %v657
      %v678 = vadd.f32 %v598, %v661
      %v679 = vadd.f32 %v599, %v665
      %v680 = vadd.f32 %v600, %v669
      %v681 = vadd.f32 %v601, %v673
      %v682 = vmax.f32 %v674, 0.0
      %v683 = vmax.f32 %v675, 0.0
      %v684 = vmax.f32 %v676, 0.0
      %v685 = vmax.f32 %v677, 0.0
      %v686 = vmax.f32 %v678, 0.0
      %v687 = vmax.f32 %v679, 0.0
      %v688 = vmax.f32 %v680, 0.0
      %v689 = vmax.f32 %v681, 0.0
      %690 = vst [vmem:[#allocation8] sm:$0xff] %v682
      %691 = vst [vmem:[#allocation8 + $0x8] sm:$0xff] %v683
      %692 = vst [vmem:[#allocation8 + $0x10] sm:$0xff] %v684
      %693 = vst [vmem:[#allocation8 + $0x18] sm:$0xff] %v685
      %694 = vst [vmem:[#allocation8 + $0x20] sm:$0xff] %v686
      %695 = vst [vmem:[#allocation8 + $0x28] sm:$0xff] %v687
      %696 = vst [vmem:[#allocation8 + $0x30] sm:$0xff] %v688
      %697 = vst [vmem:[#allocation8 + $0x38] sm:$0xff] %v689
    $region33: #{linear_model_forward.1} parent=1 // pred_fallthru
      _
    // Predicated region
    $region34: #{linear_model_forward.1} parent=1 // pred_check
      _
    $region35: #{linear_model_forward.1} parent=1 // pred_check_branch
      %699 = sbr.rel (0) target = $region37
    $region36: #{linear_model_forward.1} parent=1 // pred_region
      %s701 = ssub.s32 1024, 1024
      %702 = vsyncadd [#allocation4], %s701
      %s704 = sshll.u32 [#allocation8], 4
      %s705 = int_to_ptr.vmem [resolvable:$true] %s704
      %707 = dma.vmem_to_hbm [thread:$0]  %s705, 1024, %s3, [#allocation4]
    $region37: #{linear_model_forward.1} parent=1 // pred_fallthru
      _
    // Predicated region
    $region38: #{linear_model_forward.1} parent=1 // pred_check
      _
    $region39: #{linear_model_forward.1} parent=1 // pred_check_branch
      %709 = sbr.rel (0) target = $region41
    $region40: #{linear_model_forward.1} parent=1 // pred_region
      %710 = dma.done [#allocation4], 1024
    $region41: #{linear_model_forward.1} parent=1 // pred_fallthru
      _
    %711 = vsyncpa [#allocation3], 1
    %712 = vsyncpa [#allocation6], 1
    %713 = vsyncpa [#allocation4], 1

</llo_original>
